<compile_context>
chip_gen: v7x
topology: tpu7x:2x2x1
jax: 0.10.0
libtpu: 0.0.40
codegen_flags: <defaults>
</compile_context>

<pallas_src>
import functools

import jax
import jax.numpy as jnp
from jax.experimental import pallas as pl
from jax.experimental.pallas import tpu as pltpu

_LANES = 128                     # vreg lane width
_ROW_BLOCK = 128                 # rows per block (parallel grid axis)
_GLOBAL_ROWS = 256               # target row count for the global reshape
_MAX_TILE_COLS = 8192            # cap on column tile (<= 64 unrolled VPU folds)
_TARGET_BLOCK_BYTES = 4 << 20    # ~4 MiB sublane-padded input block per step
_VMEM_LIMIT_BYTES = 32 << 20     # safe on v5e/v6e (128 MiB) and v7x (64 MiB)


def _minmax_kernel(x_ref, min_ref, max_ref, min_acc, max_acc, *, n_cols, tile):
    """Row-wise running min/max.

    Grid: (row-blocks [parallel], column-tiles [arbitrary/reduction]).
      x_ref   : (RB, tile) input block
      min_ref : (RB, 1) output (resident across the column axis)
      max_ref : (RB, 1) output
      min_acc : (RB, 128) f32 scratch (elementwise fold accumulator)
      max_acc : (RB, 128) f32 scratch
    """
    j = pl.program_id(1)
    nj = pl.num_programs(1)

    x = x_ref[...].astype(jnp.float32)   # widen once (exact for bf16 min/max)
    rem = n_cols % tile                  # static python int

    if rem:
        # Ragged last column tile: mask out-of-bounds lanes (VPU select),
        # +inf for the min path, -inf for the max path.
        limit = jnp.where(j == nj - 1, rem, tile)
        lane = jax.lax.broadcasted_iota(jnp.int32, x.shape, 1)
        valid = lane < limit
        x_min_in = jnp.where(valid, x, jnp.inf)
        x_max_in = jnp.where(valid, x, -jnp.inf)
    else:
        x_min_in = x
        x_max_in = x

    if tile % _LANES == 0 and tile > _LANES:
        # Elementwise (VPU) fold of lane-aligned 128-wide chunks.
        nchunk = tile // _LANES
        bmin = x_min_in[:, :_LANES]
        bmax = x_max_in[:, :_LANES]
        for t in range(1, nchunk):
            sl = slice(t * _LANES, (t + 1) * _LANES)
            bmin = jnp.minimum(bmin, x_min_in[:, sl])
            bmax = jnp.maximum(bmax, x_max_in[:, sl])

        @pl.when(j == 0)
        def _():
            min_acc[...] = bmin
            max_acc[...] = bmax

        @pl.when(j > 0)
        def _():
            min_acc[...] = jnp.minimum(min_acc[...], bmin)
            max_acc[...] = jnp.maximum(max_acc[...], bmax)

        # Single cross-lane (XLU) reduce, only at the last column step.
        @pl.when(j == nj - 1)
        def _():
            min_ref[...] = jnp.min(min_acc[...], axis=-1, keepdims=True).astype(min_ref.dtype)
            max_ref[...] = jnp.max(max_acc[...], axis=-1, keepdims=True).astype(max_ref.dtype)
    else:
        # Narrow block (tile == full column extent or a single lane group).
        blk_min = jnp.min(x_min_in, axis=-1, keepdims=True)
        blk_max = jnp.max(x_max_in, axis=-1, keepdims=True)

        @pl.when(j == 0)
        def _():
            min_ref[...] = blk_min.astype(min_ref.dtype)
            max_ref[...] = blk_max.astype(max_ref.dtype)

        @pl.when(j > 0)
        def _():
            min_ref[...] = jnp.minimum(min_ref[...], blk_min.astype(min_ref.dtype))
            max_ref[...] = jnp.maximum(max_ref[...], blk_max.astype(max_ref.dtype))


@jax.jit
def _minmax_rows(x2d):
    """Per-row min/max of a 2-D float array. Returns ((R,), (R,)) in x2d.dtype."""
    r, n = x2d.shape
    dtype = x2d.dtype
    itemsize = jnp.dtype(dtype).itemsize

    rb = r if r <= _ROW_BLOCK else _ROW_BLOCK
    rb_pad = max(8, ((rb + 7) // 8) * 8)          # sublane-padded rows in VMEM

    # Column tile: as wide as a ~4 MiB (padded, per-buffer) block allows,
    # lane-aligned, capped to bound the unrolled VPU fold.  Double-buffered
    # input stays well under the scoped VMEM limit on every TPU generation.
    tile = _TARGET_BLOCK_BYTES // (rb_pad * itemsize)
    tile = max(_LANES, (tile // _LANES) * _LANES)
    tile = min(tile, _MAX_TILE_COLS)
    if n <= tile:
        tile = n                                   # full extent; no tail masking

    grid = (pl.cdiv(r, rb), pl.cdiv(n, tile))
    kernel = functools.partial(_minmax_kernel, n_cols=n, tile=tile)

    mins, maxs = pl.pallas_call(
        kernel,
        out_shape=(
            jax.ShapeDtypeStruct((r, 1), dtype),
            jax.ShapeDtypeStruct((r, 1), dtype),
        ),
        grid_spec=pltpu.PrefetchScalarGridSpec(
            num_scalar_prefetch=0,
            grid=grid,
            in_specs=[pl.BlockSpec((rb, tile), lambda i, j: (i, j))],
            out_specs=[
                pl.BlockSpec((rb, 1), lambda i, j: (i, 0)),
                pl.BlockSpec((rb, 1), lambda i, j: (i, 0)),
            ],
            scratch_shapes=[
                pltpu.VMEM((rb, _LANES), jnp.float32),
                pltpu.VMEM((rb, _LANES), jnp.float32),
            ],
        ),
        compiler_params=pltpu.CompilerParams(
            dimension_semantics=("parallel", "arbitrary"),
            vmem_limit_bytes=_VMEM_LIMIT_BYTES,
        ),
        cost_estimate=pl.CostEstimate(
            flops=2 * r * n,
            transcendentals=0,
            bytes_accessed=r * n * itemsize + 2 * r * itemsize,
        ),
    )(x2d)
    return mins[:, 0], maxs[:, 0]


@jax.jit
def _global_minmax(x):
    """Global min/max (0-d scalars) via a sublane-filled (R, N/R) reshape."""
    flat = x.reshape(-1)
    n = flat.size
    # Largest power of two <= _GLOBAL_ROWS dividing N -> zero-copy reshape.
    # (Odd N degrades to few rows; still correct and copy-free.)
    r = 1
    while r < _GLOBAL_ROWS and n % (r * 2) == 0:
        r *= 2
    body = flat.reshape(r, n // r)
    pmin, pmax = _minmax_rows(body)
    # Trivial final reduction of <= 256 partials outside the kernel.
    return jnp.min(pmin), jnp.max(pmax)


class CurrentMinMaxEstimator:
    """JAX/Pallas port of quantization.range_estimators.CurrentMinMaxEstimator.

    Lazy buffers (current_xmin / current_xmax) are materialized on the first
    forward call, like the LazyModuleMixin version; forward overwrites them
    with the current batch's min/max (in x.dtype, matching torch semantics).
    """

    def __init__(self, percentile=None, per_channel=False, quantizer=None):
        self.percentile = percentile
        self.per_channel = per_channel
        self.quantizer = quantizer
        self.current_xmin = None
        self.current_xmax = None

    def initialize_parameters(self, data):
        num_channels = data.shape[0] if self.per_channel else 1
        self.current_xmin = jnp.full((num_channels,), jnp.inf, dtype=jnp.float32)
        self.current_xmax = jnp.full((num_channels,), -jnp.inf, dtype=jnp.float32)

    def __call__(self, x):
        if self.current_xmin is None:
            self.initialize_parameters(x)

        if self.percentile:
            # TODO(synk): np.percentile (sort/selection) has no clean Pallas
            # TPU equivalent; the percentile branch is not implemented.
            raise NotImplementedError("percentile mode not supported in Pallas port")

        if self.per_channel:
            # torch: x.view(x.shape[0], -1); min/max over last axis -> (C,)
            x2d = x.reshape(x.shape[0], -1)
            xmin, xmax = _minmax_rows(x2d)
        else:
            # torch: x.min() / x.max() -> 0-d scalars
            xmin, xmax = _global_minmax(x)

        self.current_xmin = xmin
        self.current_xmax = xmax
        return self.current_xmin, self.current_xmax

    def reset(self):
        self.current_xmin = None
        self.current_xmax = None


if __name__ == "__main__":
    key = jax.random.PRNGKey(0)
    # NCHW activation, small shape: batch=2, channels=4, spatial=16x16
    x = jax.random.normal(key, (2, 4, 16, 16), dtype=jnp.float32)

    # Global (per_channel=False) estimator
    est_global = CurrentMinMaxEstimator(per_channel=False)
    g_min, g_max = est_global(x)

    # Per-channel estimator (dim 0 treated as "channels", as in the torch code)
    est_pc = CurrentMinMaxEstimator(per_channel=True)
    c_min, c_max = est_pc(x)
    jax.block_until_ready((g_min, g_max, c_min, c_max))

    # Reference checks against plain-JAX reductions
    ref_gmin, ref_gmax = jnp.min(x), jnp.max(x)
    x2d = x.reshape(x.shape[0], -1)
    ref_cmin, ref_cmax = jnp.min(x2d, axis=-1), jnp.max(x2d, axis=-1)
    assert g_min.shape == () and g_max.shape == ()
    assert c_min.shape == (2,) and c_max.shape == (2,)
    assert jnp.allclose(g_min, ref_gmin) and jnp.allclose(g_max, ref_gmax)
    assert jnp.allclose(c_min, ref_cmin) and jnp.allclose(c_max, ref_cmax)

    # Extra coverage 1: ragged column tiling (multi column block + tail mask).
    y = jax.random.normal(jax.random.PRNGKey(1), (4, 9000), dtype=jnp.float32)
    y_min, y_max = CurrentMinMaxEstimator(per_channel=True)(y)
    jax.block_until_ready((y_min, y_max))
    assert jnp.allclose(y_min, jnp.min(y, axis=-1))
    assert jnp.allclose(y_max, jnp.max(y, axis=-1))

    # Extra coverage 2: partial row block (rows not a multiple of the row tile).
    z = jax.random.normal(jax.random.PRNGKey(2), (260, 256), dtype=jnp.float32)
    z_min, z_max = CurrentMinMaxEstimator(per_channel=True)(z)
    jax.block_until_ready((z_min, z_max))
    assert jnp.allclose(z_min, jnp.min(z, axis=-1))
    assert jnp.allclose(z_max, jnp.max(z, axis=-1))

    # Extra coverage 3: odd element count in global mode (no power-of-two rows).
    w = jax.random.normal(jax.random.PRNGKey(3), (3, 5, 7, 11), dtype=jnp.float32)
    w_min, w_max = CurrentMinMaxEstimator(per_channel=False)(w)
    jax.block_until_ready((w_min, w_max))
    assert jnp.allclose(w_min, jnp.min(w)) and jnp.allclose(w_max, jnp.max(w))

    # Extra coverage 4: bf16 activations (f32 accumulation inside the kernel).
    xb = x.astype(jnp.bfloat16)
    b_min, b_max = CurrentMinMaxEstimator(per_channel=True)(xb)
    jax.block_until_ready((b_min, b_max))
    xb2d = xb.reshape(xb.shape[0], -1)
    assert jnp.allclose(b_min, jnp.min(xb2d, axis=-1))
    assert jnp.allclose(b_max, jnp.max(xb2d, axis=-1))

    print("KERNEL_OK")
</pallas_src>

<mosaic_0001>
module attributes {stable_mosaic.version = 11 : i64} {
  func.func @_minmax_kernel(%arg0: i32, %arg1: i32, %arg2: memref<128x8xf32, #tpu.memory_space<vmem>>, %arg3: memref<128x1xf32, #tpu.memory_space<vmem>>, %arg4: memref<128x1xf32, #tpu.memory_space<vmem>>, %arg5: memref<128x128xf32, #tpu.memory_space<vmem>>, %arg6: memref<128x128xf32, #tpu.memory_space<vmem>>) attributes {dimension_semantics = [#tpu.dimension_semantics<parallel>, #tpu.dimension_semantics<arbitrary>], iteration_bounds = array<i64: 2, 1>, scalar_prefetch = 0 : i64, scratch_operands = 2 : i64, tpu.core_type = #tpu.core_type<tc>, window_params = [{transform_indices = @transform_0, window_bounds = array<i64: 128, 8>}, {transform_indices = @transform_1, window_bounds = array<i64: 128, 1>}, {transform_indices = @transform_2, window_bounds = array<i64: 128, 1>}]} {
    %c0 = arith.constant 0 : index
    %c0_0 = arith.constant 0 : index
    %0 = vector.load %arg2[%c0, %c0_0] : memref<128x8xf32, #tpu.memory_space<vmem>>, vector<128x8xf32>
    %cst = arith.constant dense<0x7F800000> : vector<128xf32>
    %1 = vector.multi_reduction <minimumf>, %0, %cst [1] : vector<128x8xf32> to vector<128xf32>
    %2 = vector.shape_cast %1 : vector<128xf32> to vector<128x1xf32>
    %cst_1 = arith.constant dense<0xFF800000> : vector<128xf32>
    %3 = vector.multi_reduction <maximumf>, %0, %cst_1 [1] : vector<128x8xf32> to vector<128xf32>
    %4 = vector.shape_cast %3 : vector<128xf32> to vector<128x1xf32>
    %c0_i32 = arith.constant 0 : i32
    %5 = arith.cmpi eq, %arg1, %c0_i32 : i32
    %6 = arith.extui %5 : i1 to i32
    %c0_i32_2 = arith.constant 0 : i32
    %7 = arith.cmpi ne, %6, %c0_i32_2 : i32
    scf.if %7 {
      %c0_5 = arith.constant 0 : index
      %c0_6 = arith.constant 0 : index
      %11 = vector.load %arg3[%c0_5, %c0_6] : memref<128x1xf32, #tpu.memory_space<vmem>>, vector<128x1xf32>
      tpu.vector_store %arg3[%c0_5, %c0_6], %2 {strides = array<i32>} : memref<128x1xf32, #tpu.memory_space<vmem>>, vector<128x1xf32>,
      %c0_7 = arith.constant 0 : index
      %c0_8 = arith.constant 0 : index
      %12 = vector.load %arg4[%c0_7, %c0_8] : memref<128x1xf32, #tpu.memory_space<vmem>>, vector<128x1xf32>
      tpu.vector_store %arg4[%c0_7, %c0_8], %4 {strides = array<i32>} : memref<128x1xf32, #tpu.memory_space<vmem>>, vector<128x1xf32>,
    } else {
    }
    %c0_i32_3 = arith.constant 0 : i32
    %8 = arith.cmpi sgt, %arg1, %c0_i32_3 : i32
    %9 = arith.extui %8 : i1 to i32
    %c0_i32_4 = arith.constant 0 : i32
    %10 = arith.cmpi ne, %9, %c0_i32_4 : i32
    scf.if %10 {
      %c0_5 = arith.constant 0 : index
      %c0_6 = arith.constant 0 : index
      %11 = vector.load %arg3[%c0_5, %c0_6] : memref<128x1xf32, #tpu.memory_space<vmem>>, vector<128x1xf32>
      %12 = arith.minimumf %11, %2 : vector<128x1xf32>
      %c0_7 = arith.constant 0 : index
      %c0_8 = arith.constant 0 : index
      %13 = vector.load %arg3[%c0_7, %c0_8] : memref<128x1xf32, #tpu.memory_space<vmem>>, vector<128x1xf32>
      tpu.vector_store %arg3[%c0_7, %c0_8], %12 {strides = array<i32>} : memref<128x1xf32, #tpu.memory_space<vmem>>, vector<128x1xf32>,
      %c0_9 = arith.constant 0 : index
      %c0_10 = arith.constant 0 : index
      %14 = vector.load %arg4[%c0_9, %c0_10] : memref<128x1xf32, #tpu.memory_space<vmem>>, vector<128x1xf32>
      %15 = arith.maximumf %14, %4 : vector<128x1xf32>
      %c0_11 = arith.constant 0 : index
      %c0_12 = arith.constant 0 : index
      %16 = vector.load %arg4[%c0_11, %c0_12] : memref<128x1xf32, #tpu.memory_space<vmem>>, vector<128x1xf32>
      tpu.vector_store %arg4[%c0_11, %c0_12], %15 {strides = array<i32>} : memref<128x1xf32, #tpu.memory_space<vmem>>, vector<128x1xf32>,
    } else {
    }
    return
  }
  func.func @transform_0(%arg0: i32, %arg1: i32) -> (i32, i32) {
    %c0_i32 = arith.constant 0 : i32
    return %arg0, %arg1 : i32, i32
  }
  func.func @transform_1(%arg0: i32, %arg1: i32) -> (i32, i32) {
    %c0_i32 = arith.constant 0 : i32
    %c0_i32_0 = arith.constant 0 : i32
    return %arg0, %c0_i32 : i32, i32
  }
  func.func @transform_2(%arg0: i32, %arg1: i32) -> (i32, i32) {
    %c0_i32 = arith.constant 0 : i32
    %c0_i32_0 = arith.constant 0 : i32
    return %arg0, %c0_i32 : i32, i32
  }
}

</mosaic_0001>

<llo_original>
// kernel: _minmax_rows.1
$region0: #{_minmax_rows.1}
  #allocation0 [shape = 'u32[]', space=smem, size = 0x4, offset = 0x4, fixed_abs, tag = 'smem constant byte address 0x4 - core index']
  #allocation1 [shape = 'u32[144,128]{1,0:T(1,128)}', space=vmem, size = 0x12000, scoped, tag = 'internal scratch']
  #allocation2 [shape = 'f32[128,128]{1,0:T(8,128)}', space=vmem, size = 0x10000, scoped, tag = 'scratch operand']
  #allocation3 [shape = 'f32[128,128]{1,0:T(8,128)}', space=vmem, size = 0x10000, scoped, tag = 'scratch operand']
  %s0 = inlined_call_operand.vmem [shape: f32[256,8], index: 0, kind: input, shape index: {}]
  %s1 = inlined_call_operand.vmem [shape: f32[256,1], index: 1, kind: output, shape index: {0}]
  %s2 = inlined_call_operand.vmem [shape: f32[256,1], index: 2, kind: output, shape index: {1}]
  %3 = xla_tuple %s1, %s2
  %s4 = sld [smem:[#allocation0]]
  $region53: #{_minmax_rows.1} parent=0
    _
  %s6 = ssub.s32 1, %s4
  %s7 = scalar_select 0, %s6, %s4
  loop: start=0, step=1, limit=4
  $region2: #{_minmax_rows.1} parent=0 // loop_pre_header
    _
  $region3: #{_minmax_rows.1} parent=0 // loop_header
    %s9 = sphi 0, %s13
    %p10 = scmp.ge.s32.totalorder %s9, 4
    %s16 = sphi 0, %s28
    %s17 = sphi 0, %s24
    %s18 = sphi 0, %s16
    %s19 = sphi 0, %s17
    %s20 = sphi 0, %s18
    %s21 = sphi 0, %s19
    %s33 = sphi 0, %s35
    %s36 = sphi 0, %s33
    %s37 = sphi 0, %s36
    %s53 = sphi 0, %s37
    %s59 = sphi 0, %s61
    %s62 = sphi 0, %s59
    %s63 = sphi 0, %s62
    %s79 = sphi 0, %s63
    %s85 = sphi 0, %s87
    %s88 = sphi 0, %s85
    %s89 = sphi 0, %s88
    %s105 = sphi 0, %s89
  $region4: #{_minmax_rows.1} parent=0 // loop_header_branch
    %12 = sbr.rel (%p10) target = $region8
  $region5: #{_minmax_rows.1} parent=0 // loop_body
    %s14 = ssub.s32 %s9, 1
    %s15 = ssub.s32 %s9, 2
    %s22 = sadd.s32 1, %s17
    %p23 = scmp.ge.s32.totalorder %s22, 1
    %s24 = scalar_select %p23, 0, %s22
    %s25 = sadd.s32 1, %s16
    %s26 = scalar_select %p23, %s25, %s16
    %p27 = scmp.ge.s32.totalorder %s26, 2
    %s28 = scalar_select %p27, 0, %s26
    %s29 = ssub.s32 %s16, %s28
    %s30 = ssub.s32 %s17, %s24
    %s31 = sor.u32 %s29, %s30
    %p32 = scmp.eq.s32.totalorder %s31, 0
    %s34 = sadd.s32 %s33, 1
    %s35 = scalar_select %p32, %s33, %s34
    %p38 = pneg %p32
    %p39 = scmp.eq.s32.totalorder %s9, 1
    %p40 = por %p38, %p39
    %p41 = scmp.ne.s32.totalorder %s33, %s36
    %p42 = scmp.eq.s32.totalorder %s9, 0
    %p43 = por %p41, %p42
    %p44 = scmp.ne.s32.totalorder %s33, %s36
    %p45 = scmp.eq.s32.totalorder %s14, 1
    %p46 = por %p44, %p45
    %p47 = scmp.ne.s32.totalorder %s36, %s37
    %p48 = scmp.eq.s32.totalorder %s14, 0
    %p49 = por %p47, %p48
    %p50 = scmp.ne.s32.totalorder %s36, %s37
    %p51 = scmp.eq.s32.totalorder %s15, 1
    %p52 = por %p50, %p51
    %p54 = scmp.ne.s32.totalorder %s37, %s53
    %p55 = scmp.eq.s32.totalorder %s15, 0
    %p56 = por %p54, %p55
    %s57 = ssub.s32 %s16, %s28
    %p58 = scmp.eq.s32.totalorder %s57, 0
    %s60 = sadd.s32 %s59, 1
    %s61 = scalar_select %p58, %s59, %s60
    %p64 = pneg %p58
    %p65 = scmp.eq.s32.totalorder %s9, 1
    %p66 = por %p64, %p65
    %p67 = scmp.ne.s32.totalorder %s59, %s62
    %p68 = scmp.eq.s32.totalorder %s9, 0
    %p69 = por %p67, %p68
    %p70 = scmp.ne.s32.totalorder %s59, %s62
    %p71 = scmp.eq.s32.totalorder %s14, 1
    %p72 = por %p70, %p71
    %p73 = scmp.ne.s32.totalorder %s62, %s63
    %p74 = scmp.eq.s32.totalorder %s14, 0
    %p75 = por %p73, %p74
    %p76 = scmp.ne.s32.totalorder %s62, %s63
    %p77 = scmp.eq.s32.totalorder %s15, 1
    %p78 = por %p76, %p77
    %p80 = scmp.ne.s32.totalorder %s63, %s79
    %p81 = scmp.eq.s32.totalorder %s15, 0
    %p82 = por %p80, %p81
    %s83 = ssub.s32 %s16, %s28
    %p84 = scmp.eq.s32.totalorder %s83, 0
    %s86 = sadd.s32 %s85, 1
    %s87 = scalar_select %p84, %s85, %s86
    %p90 = pneg %p84
    %p91 = scmp.eq.s32.totalorder %s9, 1
    %p92 = por %p90, %p91
    %p93 = scmp.ne.s32.totalorder %s85, %s88
    %p94 = scmp.eq.s32.totalorder %s9, 0
    %p95 = por %p93, %p94
    %p96 = scmp.ne.s32.totalorder %s85, %s88
    %p97 = scmp.eq.s32.totalorder %s14, 1
    %p98 = por %p96, %p97
    %p99 = scmp.ne.s32.totalorder %s88, %s89
    %p100 = scmp.eq.s32.totalorder %s14, 0
    %p101 = por %p99, %p100
    %p102 = scmp.ne.s32.totalorder %s88, %s89
    %p103 = scmp.eq.s32.totalorder %s15, 1
    %p104 = por %p102, %p103
    %p106 = scmp.ne.s32.totalorder %s89, %s105
    %p107 = scmp.eq.s32.totalorder %s15, 0
    %p108 = por %p106, %p107
    %p109 = scmp.le.s32.totalorder 1, %s9
    %p110 = scmp.lt.s32.totalorder %s9, 3
    %p111 = pnand %p109, %p110
    %p112 = pneg %p111
    // Predicated region
    $region9: #{_minmax_rows.1} parent=5 // pred_check
      _
    $region10: #{_minmax_rows.1} parent=5 // pred_check_branch
      %114 = sbr.rel (%p111) target = $region12
    $region11: #{_minmax_rows.1} parent=5 // pred_region
      %s115 = ssub.s32 %s9, 1
    $region12: #{_minmax_rows.1} parent=5 // pred_fallthru
      _
    %p116 = scmp.lt.s32.totalorder %s9, 2
    // Predicated region
    $region13: #{_minmax_rows.1} parent=5 // pred_check
      %p117 = pneg %p116
    $region14: #{_minmax_rows.1} parent=5 // pred_check_branch
      %119 = sbr.rel (%p117) target = $region16
    $region15: #{_minmax_rows.1} parent=5 // pred_region
      // Predicated region
      $region17: #{_minmax_rows.1} parent=15 // pred_check
        %p120 = pneg %p43
      $region18: #{_minmax_rows.1} parent=15 // pred_check_branch
        %122 = sbr.rel (%p120) target = $region20
      $region19: #{_minmax_rows.1} parent=15 // pred_region
        %s123 = smul.u32 16, %s16
        %p124 = scmp.lt.s32.totalorder %s123, 31
        %s125 = scalar_select %p124, %s123, 31
        %p126 = scmp.lt.s32.totalorder %s17, 0
        %s127 = scalar_select %p126, %s17, 0
        %s128 = sadd.s32 %s127, %s125
        %s129 = smul.addr %s128, 8
        %s130 = scalar_lea.vmem %s0, %s129
        %s131 = smul.u32 16, %s16
      $region20: #{_minmax_rows.1} parent=15 // pred_fallthru
        _
    $region16: #{_minmax_rows.1} parent=5 // pred_fallthru
      _
    %p132 = scmp.le.s32.totalorder 1, %s9
    %p133 = scmp.lt.s32.totalorder %s9, 3
    %p134 = pnand %p132, %p133
    %p135 = pneg %p134
    // Predicated region
    $region21: #{_minmax_rows.1} parent=5 // pred_check
      _
    $region22: #{_minmax_rows.1} parent=5 // pred_check_branch
      %137 = sbr.rel (%p134) target = $region24
    $region23: #{_minmax_rows.1} parent=5 // pred_region
      %s138 = ssub.s32 %s9, 1
      %s139 = smul.u32 16, %s18
      %p140 = scmp.lt.s32.totalorder %s139, 31
      %s141 = scalar_select %p140, %s139, 31
      %p142 = scmp.lt.s32.totalorder %s19, 0
      %s143 = scalar_select %p142, %s19, 0
      %s144 = sadd.s32 %s143, %s141
      %s145 = smul.addr %s144, 8
      %s146 = scalar_lea.vmem %s0, %s145
      %p147 = pneg %p49
      %p148 = pneg %p46
      %p149 = pneg %p75
      %p150 = pneg %p72
      %s151 = smul.u32 16, %s18
      %p152 = scmp.lt.s32.totalorder %s151, 31
      %s153 = scalar_select %p152, %s151, 31
      %s154 = smul.addr %s153, 8
      %s155 = scalar_lea.vmem %s1, %s154
      %p156 = pneg %p101
      %p157 = pneg %p98
      %s158 = smul.u32 16, %s18
      %p159 = scmp.lt.s32.totalorder %s158, 31
      %s160 = scalar_select %p159, %s158, 31
      %s161 = smul.addr %s160, 8
      %s162 = scalar_lea.vmem %s2, %s161
      %s163 = smul.u32 16, %s18
      %p164 = scmp.lt.s32.totalorder %s163, 31
      %s165 = scalar_select %p164, %s163, 31
      %p166 = scmp.lt.s32.totalorder %s19, 0
      %s167 = scalar_select %p166, %s19, 0
      %s168 = sadd.s32 %s167, %s165
      %s169 = smul.addr %s168, 8
      %s170 = scalar_lea.vmem %s0, %s169
      %s171 = smul.u32 16, %s18
      %s172 = smul.u32 16, %s18
      %p173 = scmp.lt.s32.totalorder %s172, 31
      %s174 = scalar_select %p173, %s172, 31
      %s175 = smul.addr %s174, 8
      %s176 = scalar_lea.vmem %s1, %s175
      %s177 = smul.u32 16, %s18
      %s178 = smul.u32 16, %s18
      %p179 = scmp.lt.s32.totalorder %s178, 31
      %s180 = scalar_select %p179, %s178, 31
      %s181 = smul.addr %s180, 8
      %s182 = scalar_lea.vmem %s2, %s181
      %s183 = smul.u32 16, %s18
      %v184 = vld [vmem:[%s170] sm:$0xff]
      %v185 = vld [vmem:[%s170 + $0x8] sm:$0xff]
      %v186 = vld [vmem:[%s170 + $0x10] sm:$0xff]
      %v187 = vld [vmem:[%s170 + $0x18] sm:$0xff]
      %v188 = vld [vmem:[%s170 + $0x20] sm:$0xff]
      %v189 = vld [vmem:[%s170 + $0x28] sm:$0xff]
      %v190 = vld [vmem:[%s170 + $0x30] sm:$0xff]
      %v191 = vld [vmem:[%s170 + $0x38] sm:$0xff]
      %v192 = vld [vmem:[%s170 + $0x40] sm:$0xff]
      %v193 = vld [vmem:[%s170 + $0x48] sm:$0xff]
      %v194 = vld [vmem:[%s170 + $0x50] sm:$0xff]
      %v195 = vld [vmem:[%s170 + $0x58] sm:$0xff]
      %v196 = vld [vmem:[%s170 + $0x60] sm:$0xff]
      %v197 = vld [vmem:[%s170 + $0x68] sm:$0xff]
      %v198 = vld [vmem:[%s170 + $0x70] sm:$0xff]
      %v199 = vld [vmem:[%s170 + $0x78] sm:$0xff]
      %vm200 = vcmask 64512
      %v201 = vsel %vm200, %v184, inf
      %202 = vmin.xlane.f32.xlu0 %v201
      %v203 = vpop.xlane.xlu0 %202
      %v204 = vsel %vm200, %v185, inf
      %205 = vmin.xlane.f32.xlu0 %v204
      %v206 = vpop.xlane.xlu0 %205
      %v207 = vsel %vm200, %v186, inf
      %208 = vmin.xlane.f32.xlu0 %v207
      %v209 = vpop.xlane.xlu0 %208
      %v210 = vsel %vm200, %v187, inf
      %211 = vmin.xlane.f32.xlu0 %v210
      %v212 = vpop.xlane.xlu0 %211
      %v213 = vsel %vm200, %v188, inf
      %214 = vmin.xlane.f32.xlu0 %v213
      %v215 = vpop.xlane.xlu0 %214
      %v216 = vsel %vm200, %v189, inf
      %217 = vmin.xlane.f32.xlu0 %v216
      %v218 = vpop.xlane.xlu0 %217
      %v219 = vsel %vm200, %v190, inf
      %220 = vmin.xlane.f32.xlu0 %v219
      %v221 = vpop.xlane.xlu0 %220
      %v222 = vsel %vm200, %v191, inf
      %223 = vmin.xlane.f32.xlu0 %v222
      %v224 = vpop.xlane.xlu0 %223
      %v225 = vsel %vm200, %v192, inf
      %226 = vmin.xlane.f32.xlu0 %v225
      %v227 = vpop.xlane.xlu0 %226
      %v228 = vsel %vm200, %v193, inf
      %229 = vmin.xlane.f32.xlu0 %v228
      %v230 = vpop.xlane.xlu0 %229
      %v231 = vsel %vm200, %v194, inf
      %232 = vmin.xlane.f32.xlu0 %v231
      %v233 = vpop.xlane.xlu0 %232
      %v234 = vsel %vm200, %v195, inf
      %235 = vmin.xlane.f32.xlu0 %v234
      %v236 = vpop.xlane.xlu0 %235
      %v237 = vsel %vm200, %v196, inf
      %238 = vmin.xlane.f32.xlu0 %v237
      %v239 = vpop.xlane.xlu0 %238
      %v240 = vsel %vm200, %v197, inf
      %241 = vmin.xlane.f32.xlu0 %v240
      %v242 = vpop.xlane.xlu0 %241
      %v243 = vsel %vm200, %v198, inf
      %244 = vmin.xlane.f32.xlu0 %v243
      %v245 = vpop.xlane.xlu0 %244
      %v246 = vsel %vm200, %v199, inf
      %247 = vmin.xlane.f32.xlu0 %v246
      %v248 = vpop.xlane.xlu0 %247
      %v249 = vsel %vm200, %v184, -inf
      %250 = vmax.xlane.f32.xlu0 %v249
      %v251 = vpop.xlane.xlu0 %250
      %v252 = vsel %vm200, %v185, -inf
      %253 = vmax.xlane.f32.xlu0 %v252
      %v254 = vpop.xlane.xlu0 %253
      %v255 = vsel %vm200, %v186, -inf
      %256 = vmax.xlane.f32.xlu0 %v255
      %v257 = vpop.xlane.xlu0 %256
      %v258 = vsel %vm200, %v187, -inf
      %259 = vmax.xlane.f32.xlu0 %v258
      %v260 = vpop.xlane.xlu0 %259
      %v261 = vsel %vm200, %v188, -inf
      %262 = vmax.xlane.f32.xlu0 %v261
      %v263 = vpop.xlane.xlu0 %262
      %v264 = vsel %vm200, %v189, -inf
      %265 = vmax.xlane.f32.xlu0 %v264
      %v266 = vpop.xlane.xlu0 %265
      %v267 = vsel %vm200, %v190, -inf
      %268 = vmax.xlane.f32.xlu0 %v267
      %v269 = vpop.xlane.xlu0 %268
      %v270 = vsel %vm200, %v191, -inf
      %271 = vmax.xlane.f32.xlu0 %v270
      %v272 = vpop.xlane.xlu0 %271
      %v273 = vsel %vm200, %v192, -inf
      %274 = vmax.xlane.f32.xlu0 %v273
      %v275 = vpop.xlane.xlu0 %274
      %v276 = vsel %vm200, %v193, -inf
      %277 = vmax.xlane.f32.xlu0 %v276
      %v278 = vpop.xlane.xlu0 %277
      %v279 = vsel %vm200, %v194, -inf
      %280 = vmax.xlane.f32.xlu0 %v279
      %v281 = vpop.xlane.xlu0 %280
      %v282 = vsel %vm200, %v195, -inf
      %283 = vmax.xlane.f32.xlu0 %v282
      %v284 = vpop.xlane.xlu0 %283
      %v285 = vsel %vm200, %v196, -inf
      %286 = vmax.xlane.f32.xlu0 %v285
      %v287 = vpop.xlane.xlu0 %286
      %v288 = vsel %vm200, %v197, -inf
      %289 = vmax.xlane.f32.xlu0 %v288
      %v290 = vpop.xlane.xlu0 %289
      %v291 = vsel %vm200, %v198, -inf
      %292 = vmax.xlane.f32.xlu0 %v291
      %v293 = vpop.xlane.xlu0 %292
      %v294 = vsel %vm200, %v199, -inf
      %295 = vmax.xlane.f32.xlu0 %v294
      %v296 = vpop.xlane.xlu0 %295
      %p297 = scmp.eq.s32.totalorder %s19, 0
      // Predicated region
      $region25: #{_minmax_rows.1} parent=23 // pred_check
        %p298 = pneg %p297
      $region26: #{_minmax_rows.1} parent=23 // pred_check_branch
        %300 = sbr.rel (%p298) target = $region28
      $region27: #{_minmax_rows.1} parent=23 // pred_region
        %vm301 = vcmask 7168
        %302 = vst.msk [vmem:[%s176] sm:$0xff] %vm301, %v203
        %303 = vst.msk [vmem:[%s176 + $0x8] sm:$0xff] %vm301, %v206
        %304 = vst.msk [vmem:[%s176 + $0x10] sm:$0xff] %vm301, %v209
        %305 = vst.msk [vmem:[%s176 + $0x18] sm:$0xff] %vm301, %v212
        %306 = vst.msk [vmem:[%s176 + $0x20] sm:$0xff] %vm301, %v215
        %307 = vst.msk [vmem:[%s176 + $0x28] sm:$0xff] %vm301, %v218
        %308 = vst.msk [vmem:[%s176 + $0x30] sm:$0xff] %vm301, %v221
        %309 = vst.msk [vmem:[%s176 + $0x38] sm:$0xff] %vm301, %v224
        %310 = vst.msk [vmem:[%s176 + $0x40] sm:$0xff] %vm301, %v227
        %311 = vst.msk [vmem:[%s176 + $0x48] sm:$0xff] %vm301, %v230
        %312 = vst.msk [vmem:[%s176 + $0x50] sm:$0xff] %vm301, %v233
        %313 = vst.msk [vmem:[%s176 + $0x58] sm:$0xff] %vm301, %v236
        %314 = vst.msk [vmem:[%s176 + $0x60] sm:$0xff] %vm301, %v239
        %315 = vst.msk [vmem:[%s176 + $0x68] sm:$0xff] %vm301, %v242
        %316 = vst.msk [vmem:[%s176 + $0x70] sm:$0xff] %vm301, %v245
        %317 = vst.msk [vmem:[%s176 + $0x78] sm:$0xff] %vm301, %v248
        %318 = vst.msk [vmem:[%s182] sm:$0xff] %vm301, %v251
        %319 = vst.msk [vmem:[%s182 + $0x8] sm:$0xff] %vm301, %v254
        %320 = vst.msk [vmem:[%s182 + $0x10] sm:$0xff] %vm301, %v257
        %321 = vst.msk [vmem:[%s182 + $0x18] sm:$0xff] %vm301, %v260
        %322 = vst.msk [vmem:[%s182 + $0x20] sm:$0xff] %vm301, %v263
        %323 = vst.msk [vmem:[%s182 + $0x28] sm:$0xff] %vm301, %v266
        %324 = vst.msk [vmem:[%s182 + $0x30] sm:$0xff] %vm301, %v269
        %325 = vst.msk [vmem:[%s182 + $0x38] sm:$0xff] %vm301, %v272
        %326 = vst.msk [vmem:[%s182 + $0x40] sm:$0xff] %vm301, %v275
        %327 = vst.msk [vmem:[%s182 + $0x48] sm:$0xff] %vm301, %v278
        %328 = vst.msk [vmem:[%s182 + $0x50] sm:$0xff] %vm301, %v281
        %329 = vst.msk [vmem:[%s182 + $0x58] sm:$0xff] %vm301, %v284
        %330 = vst.msk [vmem:[%s182 + $0x60] sm:$0xff] %vm301, %v287
        %331 = vst.msk [vmem:[%s182 + $0x68] sm:$0xff] %vm301, %v290
        %332 = vst.msk [vmem:[%s182 + $0x70] sm:$0xff] %vm301, %v293
        %333 = vst.msk [vmem:[%s182 + $0x78] sm:$0xff] %vm301, %v296
      $region28: #{_minmax_rows.1} parent=23 // pred_fallthru
        _
      %p334 = scmp.gt.s32.totalorder %s19, 0
      // Predicated region
      $region29: #{_minmax_rows.1} parent=23 // pred_check
        %p335 = pneg %p334
      $region30: #{_minmax_rows.1} parent=23 // pred_check_branch
        %337 = sbr.rel (%p335) target = $region32
      $region31: #{_minmax_rows.1} parent=23 // pred_region
        %v338 = vld [vmem:[%s176] sm:$0xff]
        %v339 = vld [vmem:[%s176 + $0x8] sm:$0xff]
        %v340 = vld [vmem:[%s176 + $0x10] sm:$0xff]
        %v341 = vld [vmem:[%s176 + $0x18] sm:$0xff]
        %v342 = vld [vmem:[%s176 + $0x20] sm:$0xff]
        %v343 = vld [vmem:[%s176 + $0x28] sm:$0xff]
        %v344 = vld [vmem:[%s176 + $0x30] sm:$0xff]
        %v345 = vld [vmem:[%s176 + $0x38] sm:$0xff]
        %v346 = vld [vmem:[%s176 + $0x40] sm:$0xff]
        %v347 = vld [vmem:[%s176 + $0x48] sm:$0xff]
        %v348 = vld [vmem:[%s176 + $0x50] sm:$0xff]
        %v349 = vld [vmem:[%s176 + $0x58] sm:$0xff]
        %v350 = vld [vmem:[%s176 + $0x60] sm:$0xff]
        %v351 = vld [vmem:[%s176 + $0x68] sm:$0xff]
        %v352 = vld [vmem:[%s176 + $0x70] sm:$0xff]
        %v353 = vld [vmem:[%s176 + $0x78] sm:$0xff]
        %v354 = vmin.f32 %v338, %v203
        %v355 = vmin.f32 %v339, %v206
        %v356 = vmin.f32 %v340, %v209
        %v357 = vmin.f32 %v341, %v212
        %v358 = vmin.f32 %v342, %v215
        %v359 = vmin.f32 %v343, %v218
        %v360 = vmin.f32 %v344, %v221
        %v361 = vmin.f32 %v345, %v224
        %v362 = vmin.f32 %v346, %v227
        %v363 = vmin.f32 %v347, %v230
        %v364 = vmin.f32 %v348, %v233
        %v365 = vmin.f32 %v349, %v236
        %v366 = vmin.f32 %v350, %v239
        %v367 = vmin.f32 %v351, %v242
        %v368 = vmin.f32 %v352, %v245
        %v369 = vmin.f32 %v353, %v248
        %vm370 = vcmask 7168
        %371 = vst.msk [vmem:[%s176] sm:$0xff] %vm370, %v354
        %372 = vst.msk [vmem:[%s176 + $0x8] sm:$0xff] %vm370, %v355
        %373 = vst.msk [vmem:[%s176 + $0x10] sm:$0xff] %vm370, %v356
        %374 = vst.msk [vmem:[%s176 + $0x18] sm:$0xff] %vm370, %v357
        %375 = vst.msk [vmem:[%s176 + $0x20] sm:$0xff] %vm370, %v358
        %376 = vst.msk [vmem:[%s176 + $0x28] sm:$0xff] %vm370, %v359
        %377 = vst.msk [vmem:[%s176 + $0x30] sm:$0xff] %vm370, %v360
        %378 = vst.msk [vmem:[%s176 + $0x38] sm:$0xff] %vm370, %v361
        %379 = vst.msk [vmem:[%s176 + $0x40] sm:$0xff] %vm370, %v362
        %380 = vst.msk [vmem:[%s176 + $0x48] sm:$0xff] %vm370, %v363
        %381 = vst.msk [vmem:[%s176 + $0x50] sm:$0xff] %vm370, %v364
        %382 = vst.msk [vmem:[%s176 + $0x58] sm:$0xff] %vm370, %v365
        %383 = vst.msk [vmem:[%s176 + $0x60] sm:$0xff] %vm370, %v366
        %384 = vst.msk [vmem:[%s176 + $0x68] sm:$0xff] %vm370, %v367
        %385 = vst.msk [vmem:[%s176 + $0x70] sm:$0xff] %vm370, %v368
        %386 = vst.msk [vmem:[%s176 + $0x78] sm:$0xff] %vm370, %v369
        %v387 = vld [vmem:[%s182] sm:$0xff]
        %v388 = vld [vmem:[%s182 + $0x8] sm:$0xff]
        %v389 = vld [vmem:[%s182 + $0x10] sm:$0xff]
        %v390 = vld [vmem:[%s182 + $0x18] sm:$0xff]
        %v391 = vld [vmem:[%s182 + $0x20] sm:$0xff]
        %v392 = vld [vmem:[%s182 + $0x28] sm:$0xff]
        %v393 = vld [vmem:[%s182 + $0x30] sm:$0xff]
        %v394 = vld [vmem:[%s182 + $0x38] sm:$0xff]
        %v395 = vld [vmem:[%s182 + $0x40] sm:$0xff]
        %v396 = vld [vmem:[%s182 + $0x48] sm:$0xff]
        %v397 = vld [vmem:[%s182 + $0x50] sm:$0xff]
        %v398 = vld [vmem:[%s182 + $0x58] sm:$0xff]
        %v399 = vld [vmem:[%s182 + $0x60] sm:$0xff]
        %v400 = vld [vmem:[%s182 + $0x68] sm:$0xff]
        %v401 = vld [vmem:[%s182 + $0x70] sm:$0xff]
        %v402 = vld [vmem:[%s182 + $0x78] sm:$0xff]
        %v403 = vmax.f32 %v387, %v251
        %v404 = vmax.f32 %v388, %v254
        %v405 = vmax.f32 %v389, %v257
        %v406 = vmax.f32 %v390, %v260
        %v407 = vmax.f32 %v391, %v263
        %v408 = vmax.f32 %v392, %v266
        %v409 = vmax.f32 %v393, %v269
        %v410 = vmax.f32 %v394, %v272
        %v411 = vmax.f32 %v395, %v275
        %v412 = vmax.f32 %v396, %v278
        %v413 = vmax.f32 %v397, %v281
        %v414 = vmax.f32 %v398, %v284
        %v415 = vmax.f32 %v399, %v287
        %v416 = vmax.f32 %v400, %v290
        %v417 = vmax.f32 %v401, %v293
        %v418 = vmax.f32 %v402, %v296
        %419 = vst.msk [vmem:[%s182] sm:$0xff] %vm370, %v403
        %420 = vst.msk [vmem:[%s182 + $0x8] sm:$0xff] %vm370, %v404
        %421 = vst.msk [vmem:[%s182 + $0x10] sm:$0xff] %vm370, %v405
        %422 = vst.msk [vmem:[%s182 + $0x18] sm:$0xff] %vm370, %v406
        %423 = vst.msk [vmem:[%s182 + $0x20] sm:$0xff] %vm370, %v407
        %424 = vst.msk [vmem:[%s182 + $0x28] sm:$0xff] %vm370, %v408
        %425 = vst.msk [vmem:[%s182 + $0x30] sm:$0xff] %vm370, %v409
        %426 = vst.msk [vmem:[%s182 + $0x38] sm:$0xff] %vm370, %v410
        %427 = vst.msk [vmem:[%s182 + $0x40] sm:$0xff] %vm370, %v411
        %428 = vst.msk [vmem:[%s182 + $0x48] sm:$0xff] %vm370, %v412
        %429 = vst.msk [vmem:[%s182 + $0x50] sm:$0xff] %vm370, %v413
        %430 = vst.msk [vmem:[%s182 + $0x58] sm:$0xff] %vm370, %v414
        %431 = vst.msk [vmem:[%s182 + $0x60] sm:$0xff] %vm370, %v415
        %432 = vst.msk [vmem:[%s182 + $0x68] sm:$0xff] %vm370, %v416
        %433 = vst.msk [vmem:[%s182 + $0x70] sm:$0xff] %vm370, %v417
        %434 = vst.msk [vmem:[%s182 + $0x78] sm:$0xff] %vm370, %v418
      $region32: #{_minmax_rows.1} parent=23 // pred_fallthru
        _
      %s435 = smul.u32 16, %s18
      %p436 = scmp.lt.s32.totalorder %s435, 31
      %s437 = scalar_select %p436, %s435, 31
      %s438 = smul.addr %s437, 8
      %s439 = scalar_lea.vmem %s1, %s438
      %s440 = smul.u32 16, %s18
      %p441 = scmp.lt.s32.totalorder %s440, 31
      %s442 = scalar_select %p441, %s440, 31
      %s443 = smul.addr %s442, 8
      %s444 = scalar_lea.vmem %s2, %s443
      // Predicated region
      $region33: #{_minmax_rows.1} parent=23 // pred_check
        %p445 = pneg %p72
      $region34: #{_minmax_rows.1} parent=23 // pred_check_branch
        %447 = sbr.rel (%p445) target = $region36
      $region35: #{_minmax_rows.1} parent=23 // pred_region
        %s448 = smul.u32 16, %s18
      $region36: #{_minmax_rows.1} parent=23 // pred_fallthru
        _
      // Predicated region
      $region37: #{_minmax_rows.1} parent=23 // pred_check
        %p449 = pneg %p98
      $region38: #{_minmax_rows.1} parent=23 // pred_check_branch
        %451 = sbr.rel (%p449) target = $region40
      $region39: #{_minmax_rows.1} parent=23 // pred_region
        %s452 = smul.u32 16, %s18
      $region40: #{_minmax_rows.1} parent=23 // pred_fallthru
        _
    $region24: #{_minmax_rows.1} parent=5 // pred_fallthru
      _
    %p453 = scmp.le.s32.totalorder 2, %s9
    // Predicated region
    $region41: #{_minmax_rows.1} parent=5 // pred_check
      %p454 = pneg %p453
    $region42: #{_minmax_rows.1} parent=5 // pred_check_branch
      %456 = sbr.rel (%p454) target = $region44
    $region43: #{_minmax_rows.1} parent=5 // pred_region
      %s457 = ssub.s32 %s9, 2
      // Predicated region
      $region45: #{_minmax_rows.1} parent=43 // pred_check
        %p458 = pneg %p78
      $region46: #{_minmax_rows.1} parent=43 // pred_check_branch
        %460 = sbr.rel (%p458) target = $region48
      $region47: #{_minmax_rows.1} parent=43 // pred_region
        %s461 = smul.u32 16, %s20
        %p462 = scmp.lt.s32.totalorder %s461, 31
        %s463 = scalar_select %p462, %s461, 31
        %s464 = smul.addr %s463, 8
        %s465 = scalar_lea.vmem %s1, %s464
      $region48: #{_minmax_rows.1} parent=43 // pred_fallthru
        _
      // Predicated region
      $region49: #{_minmax_rows.1} parent=43 // pred_check
        %p466 = pneg %p104
      $region50: #{_minmax_rows.1} parent=43 // pred_check_branch
        %468 = sbr.rel (%p466) target = $region52
      $region51: #{_minmax_rows.1} parent=43 // pred_region
        %s469 = smul.u32 16, %s20
        %p470 = scmp.lt.s32.totalorder %s469, 31
        %s471 = scalar_select %p470, %s469, 31
        %s472 = smul.addr %s471, 8
        %s473 = scalar_lea.vmem %s2, %s472
      $region52: #{_minmax_rows.1} parent=43 // pred_fallthru
        _
    $region44: #{_minmax_rows.1} parent=5 // pred_fallthru
      _
  $region6: #{_minmax_rows.1} parent=0 // loop_footer
    %s13 = sadd.s32 1, %s9
  $region7: #{_minmax_rows.1} parent=0 // loop_footer_branch
    %8 = sbr.rel target = $region3
  $region8: #{_minmax_rows.1} parent=0 // loop_exit
    _

</llo_original>
